<compile_context>
chip_gen: v7x
topology: tpu7x:2x2x1
jax: 0.10.0
libtpu: 0.0.40
codegen_flags: <defaults>
</compile_context>

<pallas_src>
import functools
import math

import jax
import jax.numpy as jnp
from jax import lax
from jax.experimental import pallas as pl
from jax.experimental.pallas import tpu as pltpu

_MASK_VALUE = -1e30  # finite, avoids (-inf - -inf) NaNs on masked columns


def _round_up(n, m):
    return ((n + m - 1) // m) * m


def _default_kv_tile():
    """256 for v6e/v7x (2x256^2 MXU), 128 for v5e and older / unknown."""
    try:
        kind = jax.devices()[0].device_kind.lower()
    except Exception:
        return 128
    for old in ("v2", "v3", "v4", "v5"):
        if old in kind:
            return 128
    return 256


def _tiling(seq_len, q_tile, kv_tile):
    """Pick (8,128)-legal tiles and the padded sequence length."""
    assert q_tile % 8 == 0 and kv_tile % 8 == 0
    seq8 = _round_up(seq_len, 8)
    if seq8 <= q_tile and seq8 <= kv_tile:
        return seq8, seq8, seq8                        # single block on both axes
    tq = min(q_tile, seq8)
    tk = min(kv_tile, seq8)
    step = (tq * tk) // math.gcd(tq, tk)
    seq_pad = _round_up(seq8, step)
    if seq_pad > 2 * seq8:                             # pathological combo -> unify
        tq = tk = min(tq, tk)
        seq_pad = _round_up(seq8, tq)
    return seq_pad, tq, tk


# ----------------------------------------------------------------------------
# Kernel 1: fused QKV projection -> one lane-dense (tq, 3*Dp) slab.
# The softmax scale is folded into the q columns here (in-kernel, not in the
# wrapper, not in the flash inner loop).
# ----------------------------------------------------------------------------
def _qkv_proj_kernel(x_ref, w_ref, qkv_ref, *, d_pad, scale):
    qkv = lax.dot_general(
        x_ref[...], w_ref[...],
        dimension_numbers=(((1,), (1,)), ((), ())),    # x @ W.T, transpose-free
        preferred_element_type=jnp.float32,
    )
    # d_pad is a multiple of 128 -> lane-aligned static slices, lane-dense stores.
    qkv_ref[:, :d_pad] = (qkv[:, :d_pad] * jnp.float32(scale)).astype(qkv_ref.dtype)
    qkv_ref[:, d_pad:] = qkv[:, d_pad:].astype(qkv_ref.dtype)


# ----------------------------------------------------------------------------
# Kernel 2: flash attention with online softmax (f32 m/l/acc scratch).
# q arrives pre-scaled; padded kv columns are masked with a finite value.
# ----------------------------------------------------------------------------
def _flash_attn_kernel(q_ref, k_ref, v_ref, o_ref, m_sc, l_sc, acc_sc,
                       *, kv_tile, seq_len, mask_needed):
    kv = pl.program_id(1)

    @pl.when(kv == 0)
    def _():
        m_sc[...] = jnp.full_like(m_sc, -jnp.inf)
        l_sc[...] = jnp.zeros_like(l_sc)
        acc_sc[...] = jnp.zeros_like(acc_sc)

    # scores = q @ k.T, transpose-free (contract the head dim of both operands)
    s = lax.dot_general(
        q_ref[...], k_ref[...],
        dimension_numbers=(((1,), (1,)), ((), ())),
        preferred_element_type=jnp.float32,
    )
    if mask_needed:
        col = kv * kv_tile + lax.broadcasted_iota(jnp.int32, s.shape, 1)
        s = jnp.where(col < seq_len, s, jnp.float32(_MASK_VALUE))

    m_prev = m_sc[...]
    m_new = jnp.maximum(m_prev, jnp.max(s, axis=-1, keepdims=True))
    alpha = jnp.exp(m_prev - m_new)
    # TODO(synk): accuracy-gated bf16 exp path (v6e/v7x only) would halve EUP
    # work per kv step; kept f32 here to preserve the accuracy contract.
    p = jnp.exp(s - m_new)

    l_sc[...] = alpha * l_sc[...] + jnp.sum(p, axis=-1, keepdims=True)
    acc_sc[...] = alpha * acc_sc[...] + jnp.dot(
        p.astype(v_ref.dtype), v_ref[...],               # bf16 into the MXU
        preferred_element_type=jnp.float32,
    )
    m_sc[...] = m_new

    @pl.when(kv == pl.num_programs(1) - 1)
    def _():
        inv_l = pl.reciprocal(l_sc[...], approx=True)    # EUP vrcp, ~free slot
        o_ref[...] = (acc_sc[...] * inv_l).astype(o_ref.dtype)


# ----------------------------------------------------------------------------
# Wrapper
# ----------------------------------------------------------------------------
def self_attention_v2(x, w_q, w_k, w_v, *, q_tile=128, kv_tile=None):
    """SelfAttention_v2 forward (un-batched): x (seq, emb); w_* (out_dim, emb)."""
    seq_len, emb_dim = x.shape
    out_dim = w_q.shape[0]
    out_dtype = x.dtype
    if kv_tile is None:
        kv_tile = _default_kv_tile()

    # TODO(synk): on v7x, halve q_tile when seq_pad == q_tile so the "parallel"
    # query axis has >= 2 tiles and both TensorCores are used.
    seq_pad, tq, tk = _tiling(seq_len, q_tile, kv_tile)
    d_pad = _round_up(out_dim, 128)          # lane-dense q/k/v and output slabs
    scale = 1.0 / math.sqrt(out_dim)         # PyTorch: / keys.shape[-1] ** 0.5

    # bf16 MXU feeds (f32 accumulation in-kernel); zero-pad seq and head dims.
    x_b = jnp.zeros((seq_pad, emb_dim), jnp.bfloat16)
    x_b = x_b.at[:seq_len].set(x.astype(jnp.bfloat16))
    w_qkv = jnp.zeros((3 * d_pad, emb_dim), jnp.bfloat16)
    w_qkv = w_qkv.at[0 * d_pad:0 * d_pad + out_dim].set(w_q.astype(jnp.bfloat16))
    w_qkv = w_qkv.at[1 * d_pad:1 * d_pad + out_dim].set(w_k.astype(jnp.bfloat16))
    w_qkv = w_qkv.at[2 * d_pad:2 * d_pad + out_dim].set(w_v.astype(jnp.bfloat16))

    # --- Kernel 1: fused QKV projection (one lane-dense output slab) ----------
    qkv = pl.pallas_call(
        functools.partial(_qkv_proj_kernel, d_pad=d_pad, scale=scale),
        out_shape=jax.ShapeDtypeStruct((seq_pad, 3 * d_pad), jnp.bfloat16),
        grid=(seq_pad // tq,),
        in_specs=[
            pl.BlockSpec((tq, emb_dim), lambda i: (i, 0)),
            pl.BlockSpec((3 * d_pad, emb_dim), lambda i: (0, 0)),   # resident weights
        ],
        out_specs=pl.BlockSpec((tq, 3 * d_pad), lambda i: (i, 0)),
        compiler_params=pltpu.CompilerParams(
            dimension_semantics=("parallel",)),
        # TODO(synk): when scaling emb_dim / tq, set vmem_limit_bytes explicitly
        # for the v7x 64 MiB budget instead of inheriting a v6e-sized tiling.
    )(x_b, w_qkv)

    # --- Kernel 2: flash attention (online softmax over kv tiles) -------------
    out = pl.pallas_call(
        functools.partial(_flash_attn_kernel, kv_tile=tk, seq_len=seq_len,
                          mask_needed=(seq_pad != seq_len)),
        out_shape=jax.ShapeDtypeStruct((seq_pad, d_pad), out_dtype),
        grid=(seq_pad // tq, seq_pad // tk),
        in_specs=[
            pl.BlockSpec((tq, d_pad), lambda i, j: (i, 0)),   # q column block
            pl.BlockSpec((tk, d_pad), lambda i, j: (j, 1)),   # k column block
            pl.BlockSpec((tk, d_pad), lambda i, j: (j, 2)),   # v column block
        ],
        out_specs=pl.BlockSpec((tq, d_pad), lambda i, j: (i, 0)),
        scratch_shapes=[
            pltpu.VMEM((tq, 1), jnp.float32),        # running max m
            pltpu.VMEM((tq, 1), jnp.float32),        # running sum l
            pltpu.VMEM((tq, d_pad), jnp.float32),    # output accumulator
        ],
        compiler_params=pltpu.CompilerParams(
            dimension_semantics=("parallel", "arbitrary")),
    )(qkv, qkv, qkv)

    return out[:seq_len, :out_dim]


# ----------------------------------------------------------------------------
# Pure-JAX reference (f32)
# ----------------------------------------------------------------------------
def _reference(x, w_q, w_k, w_v):
    q = x @ w_q.T
    k = x @ w_k.T
    v = x @ w_v.T
    scores = q @ k.T / jnp.sqrt(jnp.float32(k.shape[-1]))
    weights = jax.nn.softmax(scores, axis=-1)
    return weights @ v


if __name__ == "__main__":
    seq_len = 8
    embedding_dim = 32
    output_dim = 16

    key = jax.random.PRNGKey(0)
    kx, kq, kk, kv = jax.random.split(key, 4)

    x = jax.random.normal(kx, (seq_len, embedding_dim), dtype=jnp.float32)

    # Deterministic parameter init (uniform, like torch Linear default range).
    bound = 1.0 / (embedding_dim ** 0.5)
    w_q = jax.random.uniform(kq, (output_dim, embedding_dim), jnp.float32, -bound, bound)
    w_k = jax.random.uniform(kk, (output_dim, embedding_dim), jnp.float32, -bound, bound)
    w_v = jax.random.uniform(kv, (output_dim, embedding_dim), jnp.float32, -bound, bound)

    out = self_attention_v2(x, w_q, w_k, w_v)
    jax.block_until_ready(out)

    ref = _reference(x, w_q, w_k, w_v)
    assert out.shape == (seq_len, output_dim)
    # bf16 MXU feeds -> loosened tolerance vs the f32 reference (accuracy contract).
    assert jnp.allclose(out, ref, atol=2e-2, rtol=2e-2), "mismatch vs JAX reference"

    print("KERNEL_OK")
</pallas_src>

<mosaic_0001>
module attributes {stable_mosaic.version = 11 : i64} {
  func.func @_qkv_proj_kernel(%arg0: i32, %arg1: memref<8x32xbf16, #tpu.memory_space<vmem>>, %arg2: memref<384x32xbf16, #tpu.memory_space<vmem>>, %arg3: memref<8x384xbf16, #tpu.memory_space<vmem>>) attributes {dimension_semantics = [#tpu.dimension_semantics<parallel>], iteration_bounds = array<i64: 1>, scalar_prefetch = 0 : i64, scratch_operands = 0 : i64, tpu.core_type = #tpu.core_type<tc>, window_params = [{transform_indices = @transform_0, window_bounds = array<i64: 8, 32>}, {pipeline_mode = #tpu.pipeline_mode<synchronous>, transform_indices = @transform_1, window_bounds = array<i64: 384, 32>}, {transform_indices = @transform_2, window_bounds = array<i64: 8, 384>}]} {
    %c0 = arith.constant 0 : index
    %c0_0 = arith.constant 0 : index
    %0 = vector.load %arg1[%c0, %c0_0] : memref<8x32xbf16, #tpu.memory_space<vmem>>, vector<8x32xbf16>
    %c0_1 = arith.constant 0 : index
    %c0_2 = arith.constant 0 : index
    %1 = vector.load %arg2[%c0_1, %c0_2] : memref<384x32xbf16, #tpu.memory_space<vmem>>, vector<384x32xbf16>
    %cst = arith.constant dense<0.000000e+00> : vector<8x384xf32>
    %2 = tpu.matmul %0, %1, %cst {dimension_numbers = #tpu.dot_dimension_numbers<[1], [1], [0], [0], [0, 0, 1, 0], [], []>} : vector<8x32xbf16>, vector<384x32xbf16>, vector<8x384xf32> -> vector<8x384xf32>
    %3 = vector.extract_strided_slice %2 {offsets = [0, 0], sizes = [8, 128], strides = [1, 1]} : vector<8x384xf32> to vector<8x128xf32>
    %cst_3 = arith.constant 2.500000e-01 : f32
    %4 = vector.broadcast %cst_3 : f32 to vector<8x128xf32>
    %5 = arith.mulf %3, %4 : vector<8x128xf32>
    %6 = arith.truncf %5 : vector<8x128xf32> to vector<8x128xbf16>
    %c0_4 = arith.constant 0 : index
    %c0_5 = arith.constant 0 : index
    %7 = vector.load %arg3[%c0_4, %c0_5] : memref<8x384xbf16, #tpu.memory_space<vmem>>, vector<8x128xbf16>
    tpu.vector_store %arg3[%c0_4, %c0_5], %6 {strides = array<i32>} : memref<8x384xbf16, #tpu.memory_space<vmem>>, vector<8x128xbf16>,
    %8 = vector.extract_strided_slice %2 {offsets = [0, 128], sizes = [8, 256], strides = [1, 1]} : vector<8x384xf32> to vector<8x256xf32>
    %9 = arith.truncf %8 : vector<8x256xf32> to vector<8x256xbf16>
    %c0_6 = arith.constant 0 : index
    %c128 = arith.constant 128 : index
    %10 = vector.load %arg3[%c0_6, %c128] : memref<8x384xbf16, #tpu.memory_space<vmem>>, vector<8x256xbf16>
    tpu.vector_store %arg3[%c0_6, %c128], %9 {strides = array<i32>} : memref<8x384xbf16, #tpu.memory_space<vmem>>, vector<8x256xbf16>,
    return
  }
  func.func @transform_0(%arg0: i32) -> (i32, i32) {
    %c0_i32 = arith.constant 0 : i32
    %c0_i32_0 = arith.constant 0 : i32
    return %arg0, %c0_i32 : i32, i32
  }
  func.func @transform_1(%arg0: i32) -> (i32, i32) {
    %c0_i32 = arith.constant 0 : i32
    %c0_i32_0 = arith.constant 0 : i32
    %c0_i32_1 = arith.constant 0 : i32
    return %c0_i32, %c0_i32_0 : i32, i32
  }
  func.func @transform_2(%arg0: i32) -> (i32, i32) {
    %c0_i32 = arith.constant 0 : i32
    %c0_i32_0 = arith.constant 0 : i32
    return %arg0, %c0_i32 : i32, i32
  }
}

</mosaic_0001>

<llo_original>
// kernel: tpu_custom_call.1
$region0: #{tpu_custom_call.1}
  #allocation0 [shape = 'u32[]', space=smem, size = 0x4, offset = 0x4, fixed_abs, tag = 'smem constant byte address 0x4 - core index']
  #allocation1 [shape = 'u32[144,128]{1,0:T(1,128)}', space=vmem, size = 0x12000, scoped, tag = 'internal scratch']
  %s0 = inlined_call_operand.vmem [shape: bf16[8,32], index: 0, kind: input, shape index: {}]
  %s1 = inlined_call_operand.vmem [shape: bf16[384,32], index: 1, kind: input, shape index: {}]
  %s2 = inlined_call_operand.hbm [shape: bf16[8,384], index: 2, kind: output, shape index: {}]
  %s3 = sld [smem:[#allocation0]]
  $region18: #{tpu_custom_call.1} parent=0
    _
  %s5 = ssub.s32 1, %s3
  %s6 = scalar_select 0, %s5, %s3
  $region1: #{tpu_custom_call.1} parent=0
    #allocation2 [shape = 'u8[6144]{0}', space=vmem, size = 0x1800, scoped, tag = 'output window, operand 0, single buffered']
    #allocation3 [shape = 's32[1]{0}', space=sflag, size = 0x4, scoped, tag = 'scoped memory for tpu_custom_call.1']
    %7 = vsyncpa [#allocation3], 0
    // Predicated region
    $region2: #{tpu_custom_call.1} parent=1 // pred_check
      _
    $region3: #{tpu_custom_call.1} parent=1 // pred_check_branch
      %9 = sbr.rel (0) target = $region5
    $region4: #{tpu_custom_call.1} parent=1 // pred_region
      _
    $region5: #{tpu_custom_call.1} parent=1 // pred_fallthru
      _
    // Predicated region
    $region6: #{tpu_custom_call.1} parent=1 // pred_check
      _
    $region7: #{tpu_custom_call.1} parent=1 // pred_check_branch
      %11 = sbr.rel (0) target = $region9
    $region8: #{tpu_custom_call.1} parent=1 // pred_region
      _
    $region9: #{tpu_custom_call.1} parent=1 // pred_fallthru
      _
    %v13 = vld [vmem:[%s0] sm:$0xf]
    %v14 = vld [vmem:[%s1] sm:$0xf]
    %v15 = vld [vmem:[%s1 + $0x4] sm:$0xf]
    %v16 = vld [vmem:[%s1 + $0x8] sm:$0xf]
    %v17 = vld [vmem:[%s1 + $0xc] sm:$0xf]
    %v18 = vld [vmem:[%s1 + $0x10] sm:$0xf]
    %v19 = vld [vmem:[%s1 + $0x14] sm:$0xf]
    %v20 = vld [vmem:[%s1 + $0x18] sm:$0xf]
    %v21 = vld [vmem:[%s1 + $0x1c] sm:$0xf]
    %v22 = vld [vmem:[%s1 + $0x20] sm:$0xf]
    %v23 = vld [vmem:[%s1 + $0x24] sm:$0xf]
    %v24 = vld [vmem:[%s1 + $0x28] sm:$0xf]
    %v25 = vld [vmem:[%s1 + $0x2c] sm:$0xf]
    %v26 = vld [vmem:[%s1 + $0x30] sm:$0xf]
    %v27 = vld [vmem:[%s1 + $0x34] sm:$0xf]
    %v28 = vld [vmem:[%s1 + $0x38] sm:$0xf]
    %v29 = vld [vmem:[%s1 + $0x3c] sm:$0xf]
    %v30 = vld [vmem:[%s1 + $0x40] sm:$0xf]
    %v31 = vld [vmem:[%s1 + $0x44] sm:$0xf]
    %v32 = vld [vmem:[%s1 + $0x48] sm:$0xf]
    %v33 = vld [vmem:[%s1 + $0x4c] sm:$0xf]
    %v34 = vld [vmem:[%s1 + $0x50] sm:$0xf]
    %v35 = vld [vmem:[%s1 + $0x54] sm:$0xf]
    %v36 = vld [vmem:[%s1 + $0x58] sm:$0xf]
    %v37 = vld [vmem:[%s1 + $0x5c] sm:$0xf]
    %v38 = vld [vmem:[%s1 + $0x60] sm:$0xf]
    %v39 = vld [vmem:[%s1 + $0x64] sm:$0xf]
    %v40 = vld [vmem:[%s1 + $0x68] sm:$0xf]
    %v41 = vld [vmem:[%s1 + $0x6c] sm:$0xf]
    %v42 = vld [vmem:[%s1 + $0x70] sm:$0xf]
    %v43 = vld [vmem:[%s1 + $0x74] sm:$0xf]
    %v44 = vld [vmem:[%s1 + $0x78] sm:$0xf]
    %v45 = vld [vmem:[%s1 + $0x7c] sm:$0xf]
    %v46 = vld [vmem:[%s1 + $0x80] sm:$0xf]
    %v47 = vld [vmem:[%s1 + $0x84] sm:$0xf]
    %v48 = vld [vmem:[%s1 + $0x88] sm:$0xf]
    %v49 = vld [vmem:[%s1 + $0x8c] sm:$0xf]
    %v50 = vld [vmem:[%s1 + $0x90] sm:$0xf]
    %v51 = vld [vmem:[%s1 + $0x94] sm:$0xf]
    %v52 = vld [vmem:[%s1 + $0x98] sm:$0xf]
    %v53 = vld [vmem:[%s1 + $0x9c] sm:$0xf]
    %v54 = vld [vmem:[%s1 + $0xa0] sm:$0xf]
    %v55 = vld [vmem:[%s1 + $0xa4] sm:$0xf]
    %v56 = vld [vmem:[%s1 + $0xa8] sm:$0xf]
    %v57 = vld [vmem:[%s1 + $0xac] sm:$0xf]
    %v58 = vld [vmem:[%s1 + $0xb0] sm:$0xf]
    %v59 = vld [vmem:[%s1 + $0xb4] sm:$0xf]
    %v60 = vld [vmem:[%s1 + $0xb8] sm:$0xf]
    %v61 = vld [vmem:[%s1 + $0xbc] sm:$0xf]
    %v110 = vunpack.c.l.b16 %v14
    %v111 = vunpack.c.l.b16 %v15
    %v112 = vunpack.c.l.b16 %v16
    %v113 = vunpack.c.l.b16 %v17
    %v114 = vunpack.c.l.b16 %v18
    %v115 = vunpack.c.l.b16 %v19
    %v116 = vunpack.c.l.b16 %v20
    %v117 = vunpack.c.l.b16 %v21
    %v118 = vunpack.c.l.b16 %v22
    %v119 = vunpack.c.l.b16 %v23
    %v120 = vunpack.c.l.b16 %v24
    %v121 = vunpack.c.l.b16 %v25
    %v122 = vunpack.c.l.b16 %v26
    %v123 = vunpack.c.l.b16 %v27
    %v124 = vunpack.c.l.b16 %v28
    %v125 = vunpack.c.l.b16 %v29
    %v126 = vunpack.c.l.b16 %v30
    %v127 = vunpack.c.l.b16 %v31
    %v128 = vunpack.c.l.b16 %v32
    %v129 = vunpack.c.l.b16 %v33
    %v130 = vunpack.c.l.b16 %v34
    %v131 = vunpack.c.l.b16 %v35
    %v132 = vunpack.c.l.b16 %v36
    %v133 = vunpack.c.l.b16 %v37
    %v134 = vunpack.c.l.b16 %v38
    %v135 = vunpack.c.l.b16 %v39
    %v136 = vunpack.c.l.b16 %v40
    %v137 = vunpack.c.l.b16 %v41
    %v138 = vunpack.c.l.b16 %v42
    %v139 = vunpack.c.l.b16 %v43
    %v140 = vunpack.c.l.b16 %v44
    %v141 = vunpack.c.l.b16 %v45
    %v142 = vunpack.c.l.b16 %v46
    %v143 = vunpack.c.l.b16 %v47
    %v144 = vunpack.c.l.b16 %v48
    %v145 = vunpack.c.l.b16 %v49
    %v146 = vunpack.c.l.b16 %v50
    %v147 = vunpack.c.l.b16 %v51
    %v148 = vunpack.c.l.b16 %v52
    %v149 = vunpack.c.l.b16 %v53
    %v150 = vunpack.c.l.b16 %v54
    %v151 = vunpack.c.l.b16 %v55
    %v152 = vunpack.c.l.b16 %v56
    %v153 = vunpack.c.l.b16 %v57
    %v154 = vunpack.c.l.b16 %v58
    %v155 = vunpack.c.l.b16 %v59
    %v156 = vunpack.c.l.b16 %v60
    %v157 = vunpack.c.l.b16 %v61
    %v158 = vpack.c.b16 %v111, %v110
    %v159 = vpack.c.b16 %v113, %v112
    %v160 = vpack.c.b16 %v115, %v114
    %v161 = vpack.c.b16 %v117, %v116
    %v162 = vpack.c.b16 %v119, %v118
    %v163 = vpack.c.b16 %v121, %v120
    %v164 = vpack.c.b16 %v123, %v122
    %v165 = vpack.c.b16 %v125, %v124
    %v166 = vpack.c.b16 %v127, %v126
    %v167 = vpack.c.b16 %v129, %v128
    %v168 = vpack.c.b16 %v131, %v130
    %v169 = vpack.c.b16 %v133, %v132
    %v170 = vpack.c.b16 %v135, %v134
    %v171 = vpack.c.b16 %v137, %v136
    %v172 = vpack.c.b16 %v139, %v138
    %v173 = vpack.c.b16 %v141, %v140
    %v174 = vpack.c.b16 %v143, %v142
    %v175 = vpack.c.b16 %v145, %v144
    %v176 = vpack.c.b16 %v147, %v146
    %v177 = vpack.c.b16 %v149, %v148
    %v178 = vpack.c.b16 %v151, %v150
    %v179 = vpack.c.b16 %v153, %v152
    %v180 = vpack.c.b16 %v155, %v154
    %v181 = vpack.c.b16 %v157, %v156
    %vm182 = vcmask 261120
    %v184 = vsel %vm182, %v13, 0
    %v187 = vsel %vm182, %v158, 0
    %v190 = vsel %vm182, %v159, 0
    %v193 = vsel %vm182, %v160, 0
    %v196 = vsel %vm182, %v161, 0
    %v199 = vsel %vm182, %v162, 0
    %v202 = vsel %vm182, %v163, 0
    %v205 = vsel %vm182, %v164, 0
    %v208 = vsel %vm182, %v165, 0
    %v211 = vsel %vm182, %v166, 0
    %v214 = vsel %vm182, %v167, 0
    %v217 = vsel %vm182, %v168, 0
    %v220 = vsel %vm182, %v169, 0
    %v223 = vsel %vm182, %v170, 0
    %v226 = vsel %vm182, %v171, 0
    %v229 = vsel %vm182, %v172, 0
    %v232 = vsel %vm182, %v173, 0
    %v235 = vsel %vm182, %v174, 0
    %v238 = vsel %vm182, %v175, 0
    %v241 = vsel %vm182, %v176, 0
    %v244 = vsel %vm182, %v177, 0
    %v247 = vsel %vm182, %v178, 0
    %v250 = vsel %vm182, %v179, 0
    %v253 = vsel %vm182, %v180, 0
    %v256 = vsel %vm182, %v181, 0
    %258 = vmatprep.subr.bf16.mxu0 0
    %259 = vmatpush1.bf16.xpose.msra.mxu0 %v187
    %260 = vmatprep.subr.bf16.mxu0 0
    %261 = vmatpush1.bf16.xpose.msra.mxu0 %v190
    %262 = vmatprep.subr.bf16.mxu0 0
    %263 = vmatpush1.bf16.xpose.msra.mxu0 %v193
    %264 = vmatprep.subr.bf16.mxu0 0
    %265 = vmatpush1.bf16.xpose.msra.mxu0 %v196
    %266 = vmatprep.subr.bf16.mxu0 0
    %267 = vmatpush1.bf16.xpose.msra.mxu0 %v199
    %268 = vmatprep.subr.bf16.mxu0 0
    %269 = vmatpush1.bf16.xpose.msra.mxu0 %v202
    %270 = vmatprep.subr.bf16.mxu0 0
    %271 = vmatpush1.bf16.xpose.msra.mxu0 %v205
    %272 = vmatprep.subr.bf16.mxu0 0
    %273 = vmatpush1.bf16.xpose.msra.mxu0 %v208
    %274 = vmatprep.subr.bf16.mxu0 0
    %275 = vmatpush1.bf16.xpose.msra.mxu0 %v211
    %276 = vmatprep.subr.bf16.mxu0 0
    %277 = vmatpush1.bf16.xpose.msra.mxu0 %v214
    %278 = vmatprep.subr.bf16.mxu0 0
    %279 = vmatpush1.bf16.xpose.msra.mxu0 %v217
    %280 = vmatprep.subr.bf16.mxu0 0
    %281 = vmatpush1.bf16.xpose.msra.mxu0 %v220
    %282 = vmatprep.subr.bf16.mxu0 0
    %283 = vmatpush1.bf16.xpose.msra.mxu0 %v223
    %284 = vmatprep.subr.bf16.mxu0 0
    %285 = vmatpush1.bf16.xpose.msra.mxu0 %v226
    %286 = vmatprep.subr.bf16.mxu0 0
    %287 = vmatpush1.bf16.xpose.msra.mxu0 %v229
    %288 = vmatprep.subr.bf16.mxu0 0
    %289 = vmatpush1.bf16.xpose.msra.mxu0 %v232
    %290 = vmatprep.mubr.bf16.mxu0 0
    %291 = vmatmul.mubr.bf16.gmra.mrb[0].mxu0 %v184
    %v292 = vpop.f32.mrb[0].mxu0
    %v293 = vadd.f32 0.0, %v292
    %v294 = vpop.f32.mrb[0].mxu0
    %v295 = vadd.f32 0.0, %v294
    %v296 = vpop.f32.mrb[0].mxu0
    %v297 = vpop.f32.mrb[0].mxu0
    %298 = vdwg.mxu0
    %299 = vmatprep.subr.bf16.mxu0 0
    %300 = vmatpush1.bf16.xpose.msra.mxu0 %v235
    %301 = vmatprep.subr.bf16.mxu0 0
    %302 = vmatpush1.bf16.xpose.msra.mxu0 %v238
    %303 = vmatprep.subr.bf16.mxu0 0
    %304 = vmatpush1.bf16.xpose.msra.mxu0 %v241
    %305 = vmatprep.subr.bf16.mxu0 0
    %306 = vmatpush1.bf16.xpose.msra.mxu0 %v244
    %307 = vmatprep.subr.bf16.mxu0 0
    %308 = vmatpush1.bf16.xpose.msra.mxu0 %v247
    %309 = vmatprep.subr.bf16.mxu0 0
    %310 = vmatpush1.bf16.xpose.msra.mxu0 %v250
    %311 = vmatprep.subr.bf16.mxu0 0
    %312 = vmatpush1.bf16.xpose.msra.mxu0 %v253
    %313 = vmatprep.subr.bf16.mxu0 0
    %314 = vmatpush1.bf16.xpose.msra.mxu0 %v256
    %315 = vmatprep.subr.bf16.mxu0 0
    %316 = vmatpush1.bf16.xpose.msra.mxu0 0
    %317 = vmatprep.subr.bf16.mxu0 0
    %318 = vmatpush1.bf16.xpose.msra.mxu0 0
    %319 = vmatprep.subr.bf16.mxu0 0
    %320 = vmatpush1.bf16.xpose.msra.mxu0 0
    %321 = vmatprep.subr.bf16.mxu0 0
    %322 = vmatpush1.bf16.xpose.msra.mxu0 0
    %323 = vmatprep.subr.bf16.mxu0 0
    %324 = vmatpush1.bf16.xpose.msra.mxu0 0
    %325 = vmatprep.subr.bf16.mxu0 0
    %326 = vmatpush1.bf16.xpose.msra.mxu0 0
    %327 = vmatprep.subr.bf16.mxu0 0
    %328 = vmatpush1.bf16.xpose.msra.mxu0 0
    %329 = vmatprep.subr.bf16.mxu0 0
    %330 = vmatpush1.bf16.xpose.msra.mxu0 0
    %331 = vmatprep.mubr.bf16.mxu0 0
    %332 = vmatmul.mubr.bf16.gmra.mrb[0].mxu0 %v184
    %v333 = vpop.f32.mrb[0].mxu0
    %v334 = vadd.f32 0.0, %v333
    %v335 = vpop.f32.mrb[0].mxu0
    %v336 = vpop.f32.mrb[0].mxu0
    %v337 = vpop.f32.mrb[0].mxu0
    %338 = vdwg.mxu0
    %v339 = vmul.f32 %v293, 0.25
    %v340 = vpack.c.bf16 %v339, %v339
    %341 = vst [vmem:[#allocation2] sm:$0xf] %v340
    %v342 = vpack.c.bf16 %v295, %v295
    %v343 = vpack.c.bf16 %v334, %v334
    %v346 = vunpack.c.l.b16 %v342
    %v347 = vunpack.c.l.b16 %v343
    %v348 = vpack.c.b16 %v347, %v346
    %350 = vst [vmem:[#allocation2 + $0x4] sm:$0xff] %v348
    // Predicated region
    $region10: #{tpu_custom_call.1} parent=1 // pred_check
      _
    $region11: #{tpu_custom_call.1} parent=1 // pred_check_branch
      %352 = sbr.rel (0) target = $region13
    $region12: #{tpu_custom_call.1} parent=1 // pred_region
      %s354 = ssub.s32 192, 192
      %355 = vsyncadd [#allocation3], %s354
      %s357 = sshll.u32 [#allocation2], 4
      %s358 = int_to_ptr.vmem [resolvable:$true] %s357
      %360 = dma.vmem_to_hbm [thread:$0]  %s358, 192, %s2, [#allocation3]
    $region13: #{tpu_custom_call.1} parent=1 // pred_fallthru
      _
    // Predicated region
    $region14: #{tpu_custom_call.1} parent=1 // pred_check
      _
    $region15: #{tpu_custom_call.1} parent=1 // pred_check_branch
      %362 = sbr.rel (0) target = $region17
    $region16: #{tpu_custom_call.1} parent=1 // pred_region
      %363 = dma.done [#allocation3], 192
    $region17: #{tpu_custom_call.1} parent=1 // pred_fallthru
      _
    %364 = vsyncpa [#allocation3], 1

</llo_original>
